<compile_context>
chip_gen: v7x
topology: tpu7x:2x2x1
jax: 0.10.0
libtpu: 0.0.40
codegen_flags: <defaults>
</compile_context>

<pallas_src>
import functools

import jax
import jax.numpy as jnp
from jax.experimental import pallas as pl
from jax.experimental.pallas import tpu as pltpu

PATCH_SIZE = 16
MEAN_VAL = 0.6


def _tpu_vmem_capacity_bytes():
    try:
        cap = getattr(pltpu.get_tpu_info(), "vmem_capacity_bytes", None)
        if cap:
            return int(cap)
    except Exception:
        pass
    return 64 << 20  # conservative fallback (v7x per-core VMEM)


def _tpu_num_tensorcores():
    # Defensive probe; defaults to 1 (correct for v5e/v6e, only a perf miss on
    # multi-TC parts if the attribute name is absent).
    try:
        info = pltpu.get_tpu_info()
        for attr in ("num_cores", "core_count", "num_tensorcores", "tensorcore_count"):
            v = getattr(info, attr, None)
            if v:
                return max(1, int(v))
    except Exception:
        pass
    return 1


def _exposure_loss_kernel(x_ref, awt_ref, ahc_ref, out_ref, acc_ref, *,
                          bt, batch, mean_val):
    c = pl.program_id(0)
    b = pl.program_id(1)
    nb = pl.num_programs(1)

    @pl.when(b == 0)
    def _init():
        acc_ref[...] = jnp.zeros_like(acc_ref)

    awt = awt_ref[...]      # (W, Wp)   column pooling, x.dtype (stationary MXU RHS)
    ahc = ahc_ref[...]      # (Hp, C*H) fused channel-mean + row pooling, f32

    # Dynamic valid-image count for this block (handles ragged batches without
    # any host-side padding copy; tail VMEM beyond n_valid is never touched).
    start = (c * nb + b) * bt
    n_valid = jnp.maximum(jnp.minimum(bt, batch - start), 0)

    @pl.loop(0, n_valid)
    def _per_image(i):
        xi = x_ref[i]                                                     # (C*H, W)
        colp = jnp.dot(xi, awt, preferred_element_type=jnp.float32)      # (C*H, Wp)
        pooled = jnp.dot(ahc, colp, preferred_element_type=jnp.float32)  # (Hp, Wp)
        diff = pooled - mean_val
        acc_ref[...] += diff * diff

    @pl.when(b == nb - 1)
    def _finalize():
        # Single cross-lane reduce + lane-dense (8,128) partial-sum tile per core.
        out_ref[...] = jnp.broadcast_to(
            jnp.sum(acc_ref[...], keepdims=True), out_ref.shape)


def exposure_loss(x, patch_size=PATCH_SIZE, mean_val=MEAN_VAL, *, block_bytes=None):
    """x: (B, C, H, W) with H % patch_size == 0 and W % patch_size == 0."""
    B, C, H, W = x.shape
    P = int(patch_size)
    assert H % P == 0 and W % P == 0, "spatial dims must be divisible by patch_size"
    Hp, Wp = H // P, W // P
    CH = C * H
    mean_val = float(mean_val)

    x_dtype = jnp.dtype(x.dtype)
    pool_dtype = (x_dtype if (jnp.issubdtype(x_dtype, jnp.floating)
                              and x_dtype.itemsize <= 4) else jnp.float32)

    itemsize = x_dtype.itemsize
    img_bytes = CH * W * itemsize

    vmem_cap = _tpu_vmem_capacity_bytes()
    if block_bytes is None:
        block_bytes = vmem_cap // 4          # ~16 MiB on v7x, ~32 MiB on v5e/v6e
    # Clamp the TILE (not the VMEM limit) so a double-buffered block always fits.
    block_bytes = min(int(block_bytes), max(img_bytes, (vmem_cap - (16 << 20)) // 2))
    bt = int(max(1, min(B, block_bytes // img_bytes)))   # images packed per grid step

    nb_total = -(-B // bt)                               # blocks covering the batch
    nc = max(1, min(_tpu_num_tensorcores(), nb_total))   # leading "parallel" axis
    nb = -(-nb_total // nc)                              # blocks per core

    # (B, C, H, W) -> (B, C*H, W): contiguous reshape, no padding, no extra copy.
    xv = x.reshape(B, CH, W)

    # Pooling matrices (trace-time constants).
    #   awt (W, Wp): column pooling in x.dtype -> the big matmul runs native.
    #   ahc (Hp, C*H): fused channel-mean + row pooling, kept f32 (tiny matmul).
    awt = (jnp.kron(jnp.eye(Wp, dtype=jnp.float32),
                    jnp.ones((P, 1), jnp.float32)) / P).astype(pool_dtype)
    rows = jnp.kron(jnp.eye(Hp, dtype=jnp.float32),
                    jnp.ones((1, P), jnp.float32)) / P
    ahc = jnp.tile(rows, (1, C)) / C                      # (Hp, C*H), f32

    block_x_bytes = bt * img_bytes
    const_bytes = W * Wp * jnp.dtype(pool_dtype).itemsize + Hp * CH * 4
    vmem_limit = 2 * block_x_bytes + 2 * const_bytes + (8 << 20)
    vmem_limit = int(min(max(vmem_limit, 32 << 20), vmem_cap))

    last_block = nb_total - 1
    if nc == 1:
        x_index_map = lambda c, b: (b, 0, 0)
    else:
        # Cores may overshoot the block range on ragged splits; clamp the block
        # index (wasted DMA only) and let n_valid<=0 skip the compute.
        x_index_map = lambda c, b: (jnp.minimum(c * nb + b, last_block), 0, 0)

    kernel = functools.partial(_exposure_loss_kernel,
                               bt=bt, batch=B, mean_val=mean_val)

    out = pl.pallas_call(
        kernel,
        out_shape=jax.ShapeDtypeStruct((nc * 8, 128), jnp.float32),
        grid_spec=pltpu.PrefetchScalarGridSpec(
            num_scalar_prefetch=0,
            grid=(nc, nb),
            in_specs=[
                pl.BlockSpec((bt, CH, W), x_index_map),
                pl.BlockSpec((W, Wp), lambda c, b: (0, 0)),
                pl.BlockSpec((Hp, CH), lambda c, b: (0, 0)),
            ],
            out_specs=pl.BlockSpec((8, 128), lambda c, b: (c, 0)),
            scratch_shapes=[pltpu.VMEM((Hp, Wp), jnp.float32)],
        ),
        compiler_params=pltpu.CompilerParams(
            dimension_semantics=("parallel", "arbitrary"),
            vmem_limit_bytes=vmem_limit,
        ),
    )(xv, awt, ahc)

    total = jnp.sum(out[::8, 0])             # sum of per-core partial sums
    return total / jnp.float32(B * Hp * Wp)


def _exposure_loss_ref(x, patch_size=PATCH_SIZE, mean_val=MEAN_VAL):
    B, C, H, W = x.shape
    m = jnp.mean(x.astype(jnp.float32), axis=1)                     # (B,H,W)
    Hp, Wp = H // patch_size, W // patch_size
    pool = m.reshape(B, Hp, patch_size, Wp, patch_size).mean(axis=(2, 4))
    return jnp.mean((pool - mean_val) ** 2)


if __name__ == "__main__":
    key = jax.random.PRNGKey(0)
    k1, k2, k3 = jax.random.split(key, 3)

    # Case 1: simple path (single block), default mean_val, f32.
    x1 = jax.random.uniform(k1, (2, 4, 32, 32), dtype=jnp.float32)
    got1 = jax.block_until_ready(exposure_loss(x1))
    ref1 = jax.block_until_ready(_exposure_loss_ref(x1))
    assert jnp.allclose(got1, ref1, rtol=1e-4, atol=1e-6), (got1, ref1)

    # Case 2: ragged batch (B=5 with bt=2 -> partial last block handled in-kernel,
    # no jnp.pad copy), multi-step accumulation, non-default mean_val.
    x2 = jax.random.uniform(k2, (5, 3, 32, 32), dtype=jnp.float32)
    got2 = jax.block_until_ready(
        exposure_loss(x2, mean_val=0.5, block_bytes=2 * 3 * 32 * 32 * 4))
    ref2 = jax.block_until_ready(_exposure_loss_ref(x2, mean_val=0.5))
    assert jnp.allclose(got2, ref2, rtol=1e-4, atol=1e-6), (got2, ref2)

    # Case 3: bf16 input -> native bf16 MXU column pooling, f32 accumulation.
    x3 = jax.random.uniform(k3, (3, 3, 32, 32), dtype=jnp.float32).astype(jnp.bfloat16)
    got3 = jax.block_until_ready(exposure_loss(x3))
    ref3 = jax.block_until_ready(_exposure_loss_ref(x3))
    assert jnp.allclose(got3, ref3, rtol=2e-3, atol=1e-5), (got3, ref3)

    print("KERNEL_OK")
</pallas_src>

<mosaic_0001>
module attributes {stable_mosaic.version = 11 : i64} {
  func.func @_exposure_loss_kernel(%arg0: i32, %arg1: i32, %arg2: memref<2x128x32xf32, #tpu.memory_space<vmem>>, %arg3: memref<32x2xf32, #tpu.memory_space<vmem>>, %arg4: memref<2x128xf32, #tpu.memory_space<vmem>>, %arg5: memref<8x128xf32, #tpu.memory_space<vmem>>, %arg6: memref<2x2xf32, #tpu.memory_space<vmem>>) attributes {dimension_semantics = [#tpu.dimension_semantics<parallel>, #tpu.dimension_semantics<arbitrary>], iteration_bounds = array<i64: 1, 1>, scalar_prefetch = 0 : i64, scratch_operands = 1 : i64, tpu.core_type = #tpu.core_type<tc>, window_params = [{transform_indices = @transform_0, window_bounds = array<i64: 2, 128, 32>}, {pipeline_mode = #tpu.pipeline_mode<synchronous>, transform_indices = @transform_1, window_bounds = array<i64: 32, 2>}, {pipeline_mode = #tpu.pipeline_mode<synchronous>, transform_indices = @transform_2, window_bounds = array<i64: 2, 128>}, {transform_indices = @transform_3, window_bounds = array<i64: 8, 128>}]} {
    %c0_i32 = arith.constant 0 : i32
    %0 = arith.cmpi eq, %arg1, %c0_i32 : i32
    %1 = arith.extui %0 : i1 to i32
    %c0_i32_0 = arith.constant 0 : i32
    %2 = arith.cmpi ne, %1, %c0_i32_0 : i32
    scf.if %2 {
      %cst = arith.constant 0.000000e+00 : f32
      %20 = vector.broadcast %cst : f32 to vector<2x2xf32>
      %c0_17 = arith.constant 0 : index
      %c0_18 = arith.constant 0 : index
      %21 = vector.load %arg6[%c0_17, %c0_18] : memref<2x2xf32, #tpu.memory_space<vmem>>, vector<2x2xf32>
      tpu.vector_store %arg6[%c0_17, %c0_18], %20 {strides = array<i32>} : memref<2x2xf32, #tpu.memory_space<vmem>>, vector<2x2xf32>,
    } else {
    }
    %c0 = arith.constant 0 : index
    %c0_1 = arith.constant 0 : index
    %3 = vector.load %arg3[%c0, %c0_1] : memref<32x2xf32, #tpu.memory_space<vmem>>, vector<32x2xf32>
    %c0_2 = arith.constant 0 : index
    %c0_3 = arith.constant 0 : index
    %4 = vector.load %arg4[%c0_2, %c0_3] : memref<2x128xf32, #tpu.memory_space<vmem>>, vector<2x128xf32>
    %c1_i32 = arith.constant 1 : i32
    %5 = arith.muli %arg0, %c1_i32 : i32
    %6 = arith.addi %5, %arg1 : i32
    %c2_i32 = arith.constant 2 : i32
    %7 = arith.muli %6, %c2_i32 : i32
    %c2_i32_4 = arith.constant 2 : i32
    %8 = arith.subi %c2_i32_4, %7 : i32
    %c2_i32_5 = arith.constant 2 : i32
    %9 = arith.minsi %c2_i32_5, %8 : i32
    %c0_i32_6 = arith.constant 0 : i32
    %10 = arith.maxsi %9, %c0_i32_6 : i32
    %c0_i32_7 = arith.constant 0 : i32
    %11 = arith.subi %10, %c0_i32_7 : i32
    %c1_i32_8 = arith.constant 1 : i32
    %c1_i32_9 = arith.constant 1 : i32
    %12 = arith.subi %c1_i32_8, %c1_i32_9 : i32
    %13 = arith.addi %11, %12 : i32
    %c1_i32_10 = arith.constant 1 : i32
    %14 = arith.divsi %13, %c1_i32_10 : i32
    %c1_i32_11 = arith.constant 1 : i32
    %c0_i32_12 = arith.constant 0 : i32
    %c0_i32_13 = arith.constant 0 : i32
    %15 = arith.subi %14, %c0_i32_13 : i32
    %16 = arith.addi %c0_i32_13, %15 : i32
    %c1_i32_14 = arith.constant 1 : i32
    scf.for %arg7 = %c0_i32_13 to %16 step %c1_i32_14  : i32 {
      %20 = arith.muli %arg7, %c1_i32_11 : i32
      %21 = arith.addi %c0_i32_12, %20 : i32
      %22 = arith.index_cast %21 : i32 to index
      %c0_17 = arith.constant 0 : index
      %c0_18 = arith.constant 0 : index
      %23 = vector.load %arg2[%22, %c0_17, %c0_18] : memref<2x128x32xf32, #tpu.memory_space<vmem>>, vector<1x128x32xf32>
      %24 = vector.shape_cast %23 : vector<1x128x32xf32> to vector<128x32xf32>
      %cst = arith.constant dense<0.000000e+00> : vector<128x2xf32>
      %25 = tpu.matmul %24, %3, %cst {dimension_numbers = #tpu.dot_dimension_numbers<[1], [0], [0], [1], [0, 0, 1, 1], [], []>} : vector<128x32xf32>, vector<32x2xf32>, vector<128x2xf32> -> vector<128x2xf32>
      %cst_19 = arith.constant dense<0.000000e+00> : vector<2x2xf32>
      %26 = tpu.matmul %4, %25, %cst_19 {dimension_numbers = #tpu.dot_dimension_numbers<[1], [0], [0], [1], [0, 0, 1, 1], [], []>} : vector<2x128xf32>, vector<128x2xf32>, vector<2x2xf32> -> vector<2x2xf32>
      %cst_20 = arith.constant 6.000000e-01 : f32
      %27 = vector.broadcast %cst_20 : f32 to vector<2x2xf32>
      %28 = arith.subf %26, %27 : vector<2x2xf32>
      %c0_21 = arith.constant 0 : index
      %c0_22 = arith.constant 0 : index
      %29 = vector.load %arg6[%c0_21, %c0_22] : memref<2x2xf32, #tpu.memory_space<vmem>>, vector<2x2xf32>
      %30 = arith.mulf %28, %28 : vector<2x2xf32>
      %31 = arith.addf %29, %30 : vector<2x2xf32>
      %c0_23 = arith.constant 0 : index
      %c0_24 = arith.constant 0 : index
      %32 = vector.load %arg6[%c0_23, %c0_24] : memref<2x2xf32, #tpu.memory_space<vmem>>, vector<2x2xf32>
      tpu.vector_store %arg6[%c0_23, %c0_24], %31 {strides = array<i32>} : memref<2x2xf32, #tpu.memory_space<vmem>>, vector<2x2xf32>,
    }
    %c0_i32_15 = arith.constant 0 : i32
    %17 = arith.cmpi eq, %arg1, %c0_i32_15 : i32
    %18 = arith.extui %17 : i1 to i32
    %c0_i32_16 = arith.constant 0 : i32
    %19 = arith.cmpi ne, %18, %c0_i32_16 : i32
    scf.if %19 {
      %c0_17 = arith.constant 0 : index
      %c0_18 = arith.constant 0 : index
      %20 = vector.load %arg6[%c0_17, %c0_18] : memref<2x2xf32, #tpu.memory_space<vmem>>, vector<2x2xf32>
      %21 = vector.shape_cast %20 : vector<2x2xf32> to vector<1x2x2xf32>
      %cst = arith.constant dense<0.000000e+00> : vector<1xf32>
      %22 = vector.multi_reduction <add>, %21, %cst [1, 2] : vector<1x2x2xf32> to vector<1xf32>
      %23 = vector.shape_cast %22 : vector<1xf32> to vector<1x1x1xf32>
      %24 = vector.extract %23[0, 0, 0] : f32 from vector<1x1x1xf32>
      %25 = vector.broadcast %24 : f32 to vector<1x1xf32>
      %26 = vector.shape_cast %25 : vector<1x1xf32> to vector<1x1xf32>
      %27 = vector.broadcast %26 : vector<1x1xf32> to vector<8x128xf32>
      %c0_19 = arith.constant 0 : index
      %c0_20 = arith.constant 0 : index
      %28 = vector.load %arg5[%c0_19, %c0_20] : memref<8x128xf32, #tpu.memory_space<vmem>>, vector<8x128xf32>
      tpu.vector_store %arg5[%c0_19, %c0_20], %27 {strides = array<i32>} : memref<8x128xf32, #tpu.memory_space<vmem>>, vector<8x128xf32>,
    } else {
    }
    return
  }
  func.func @transform_0(%arg0: i32, %arg1: i32) -> (i32, i32, i32) {
    %c0_i32 = arith.constant 0 : i32
    %c0_i32_0 = arith.constant 0 : i32
    %c0_i32_1 = arith.constant 0 : i32
    return %arg1, %c0_i32, %c0_i32_0 : i32, i32, i32
  }
  func.func @transform_1(%arg0: i32, %arg1: i32) -> (i32, i32) {
    %c0_i32 = arith.constant 0 : i32
    %c0_i32_0 = arith.constant 0 : i32
    %c0_i32_1 = arith.constant 0 : i32
    return %c0_i32, %c0_i32_0 : i32, i32
  }
  func.func @transform_2(%arg0: i32, %arg1: i32) -> (i32, i32) {
    %c0_i32 = arith.constant 0 : i32
    %c0_i32_0 = arith.constant 0 : i32
    %c0_i32_1 = arith.constant 0 : i32
    return %c0_i32, %c0_i32_0 : i32, i32
  }
  func.func @transform_3(%arg0: i32, %arg1: i32) -> (i32, i32) {
    %c0_i32 = arith.constant 0 : i32
    %c0_i32_0 = arith.constant 0 : i32
    return %arg0, %c0_i32 : i32, i32
  }
}

</mosaic_0001>

<llo_original>
// kernel: tpu_custom_call.1
$region0: #{tpu_custom_call.1}
  #allocation0 [shape = 'u32[]', space=smem, size = 0x4, offset = 0x4, fixed_abs, tag = 'smem constant byte address 0x4 - core index']
  #allocation1 [shape = 'u32[144,128]{1,0:T(1,128)}', space=vmem, size = 0x12000, scoped, tag = 'internal scratch']
  #allocation2 [shape = 'f32[2,2]{1,0:T(2,128)}', space=vmem, size = 0x400, scoped, tag = 'scratch operand']
  %s0 = inlined_call_operand.vmem [shape: f32[2,128,32], index: 0, kind: input, shape index: {}]
  %s1 = inlined_call_operand.vmem [shape: f32[32,2], index: 1, kind: input, shape index: {}]
  %s2 = inlined_call_operand.vmem [shape: f32[2,128], index: 2, kind: input, shape index: {}]
  %s3 = inlined_call_operand.hbm [shape: f32[8,128], index: 3, kind: output, shape index: {}]
  %s4 = sld [smem:[#allocation0]]
  $region37: #{tpu_custom_call.1} parent=0
    _
  %s6 = ssub.s32 1, %s4
  %s7 = scalar_select 0, %s6, %s4
  $region1: #{tpu_custom_call.1} parent=0
    #allocation3 [shape = 'u8[4096]{0}', space=vmem, size = 0x1000, scoped, tag = 'output window, operand 0, single buffered']
    #allocation4 [shape = 's32[1]{0}', space=sflag, size = 0x4, scoped, tag = 'scoped memory for tpu_custom_call.1']
    %8 = vsyncpa [#allocation4], 0
    // Predicated region
    $region2: #{tpu_custom_call.1} parent=1 // pred_check
      _
    $region3: #{tpu_custom_call.1} parent=1 // pred_check_branch
      %10 = sbr.rel (0) target = $region5
    $region4: #{tpu_custom_call.1} parent=1 // pred_region
      _
    $region5: #{tpu_custom_call.1} parent=1 // pred_fallthru
      _
    // Predicated region
    $region6: #{tpu_custom_call.1} parent=1 // pred_check
      _
    $region7: #{tpu_custom_call.1} parent=1 // pred_check_branch
      %12 = sbr.rel (0) target = $region9
    $region8: #{tpu_custom_call.1} parent=1 // pred_region
      _
    $region9: #{tpu_custom_call.1} parent=1 // pred_fallthru
      _
    // Predicated region
    $region10: #{tpu_custom_call.1} parent=1 // pred_check
      _
    $region11: #{tpu_custom_call.1} parent=1 // pred_check_branch
      %14 = sbr.rel (0) target = $region13
    $region12: #{tpu_custom_call.1} parent=1 // pred_region
      _
    $region13: #{tpu_custom_call.1} parent=1 // pred_fallthru
      _
    %p15 = scmp.eq.s32.totalorder 0, 0
    // Predicated region
    $region14: #{tpu_custom_call.1} parent=1 // pred_check
      %p16 = pneg %p15
    $region15: #{tpu_custom_call.1} parent=1 // pred_check_branch
      %18 = sbr.rel (%p16) target = $region17
    $region16: #{tpu_custom_call.1} parent=1 // pred_region
      %vm19 = vcmask 9216
      %20 = vst.msk [vmem:[#allocation2] sm:$0x3] %vm19, 0.0
    $region17: #{tpu_custom_call.1} parent=1 // pred_fallthru
      _
    %v21 = vld [vmem:[%s1] sm:$0xff]
    %v22 = vld [vmem:[%s1 + $0x8] sm:$0xff]
    %v23 = vld [vmem:[%s1 + $0x10] sm:$0xff]
    %v24 = vld [vmem:[%s1 + $0x18] sm:$0xff]
    %v25 = vld [vmem:[%s2] sm:$0x3]
    %s26 = sadd.s32 0, 0
    %s27 = smul.u32 %s26, 2
    %s28 = ssub.s32 2, %s27
    %p29 = scmp.lt.s32.totalorder %s28, 2
    %s30 = scalar_select %p29, %s28, 2
    %p31 = scmp.gt.s32.totalorder %s30, 0
    %s32 = scalar_select %p31, %s30, 0
    // While loop
    $region18: #{tpu_custom_call.1} parent=1 // loop_pre_header
      _
    $region19: #{tpu_custom_call.1} parent=1 // loop_header
      %s34 = sphi 0, %s36
      %p35 = scmp.ge.s32.totalorder %s34, %s32
    $region20: #{tpu_custom_call.1} parent=1 // loop_header_branch
      %38 = sbr.rel (%p35) target = $region24
    $region21: #{tpu_custom_call.1} parent=1 // loop_body
      %s39 = smul.u32 %s34, 128
      %s40 = scalar_lea.vmem %s0, %s39
      %v41 = vld [vmem:[%s40] sm:$0xff]
      %v42 = vld [vmem:[%s40 + $0x8] sm:$0xff]
      %v43 = vld [vmem:[%s40 + $0x10] sm:$0xff]
      %v44 = vld [vmem:[%s40 + $0x18] sm:$0xff]
      %v45 = vld [vmem:[%s40 + $0x20] sm:$0xff]
      %v46 = vld [vmem:[%s40 + $0x28] sm:$0xff]
      %v47 = vld [vmem:[%s40 + $0x30] sm:$0xff]
      %v48 = vld [vmem:[%s40 + $0x38] sm:$0xff]
      %v49 = vld [vmem:[%s40 + $0x40] sm:$0xff]
      %v50 = vld [vmem:[%s40 + $0x48] sm:$0xff]
      %v51 = vld [vmem:[%s40 + $0x50] sm:$0xff]
      %v52 = vld [vmem:[%s40 + $0x58] sm:$0xff]
      %v53 = vld [vmem:[%s40 + $0x60] sm:$0xff]
      %v54 = vld [vmem:[%s40 + $0x68] sm:$0xff]
      %v55 = vld [vmem:[%s40 + $0x70] sm:$0xff]
      %v56 = vld [vmem:[%s40 + $0x78] sm:$0xff]
      %vm57 = vcmask 261120
      %v59 = vsel %vm57, %v41, 0
      %v62 = vsel %vm57, %v42, 0
      %v65 = vsel %vm57, %v43, 0
      %v68 = vsel %vm57, %v44, 0
      %v71 = vsel %vm57, %v45, 0
      %v74 = vsel %vm57, %v46, 0
      %v77 = vsel %vm57, %v47, 0
      %v80 = vsel %vm57, %v48, 0
      %v83 = vsel %vm57, %v49, 0
      %v86 = vsel %vm57, %v50, 0
      %v89 = vsel %vm57, %v51, 0
      %v92 = vsel %vm57, %v52, 0
      %v95 = vsel %vm57, %v53, 0
      %v98 = vsel %vm57, %v54, 0
      %v101 = vsel %vm57, %v55, 0
      %v104 = vsel %vm57, %v56, 0
      %106 = vmatprep.subr.mxu0 0.0
      %107 = vmatpush1.msra.mxu0 %v21
      %108 = vmatprep.subr.mxu0 0.0
      %109 = vmatpush1.msra.mxu0 %v22
      %110 = vmatprep.subr.mxu0 0.0
      %111 = vmatpush1.msra.mxu0 %v23
      %112 = vmatprep.subr.mxu0 0.0
      %113 = vmatpush1.msra.mxu0 %v24
      %114 = vmatprep.subr.mxu0 0.0
      %115 = vmatpush1.msra.mxu0 0.0
      %116 = vmatprep.subr.mxu0 0.0
      %117 = vmatpush1.msra.mxu0 0.0
      %118 = vmatprep.subr.mxu0 0.0
      %119 = vmatpush1.msra.mxu0 0.0
      %120 = vmatprep.subr.mxu0 0.0
      %121 = vmatpush1.msra.mxu0 0.0
      %122 = vmatprep.subr.mxu0 0.0
      %123 = vmatpush1.msra.mxu0 0.0
      %124 = vmatprep.subr.mxu0 0.0
      %125 = vmatpush1.msra.mxu0 0.0
      %126 = vmatprep.subr.mxu0 0.0
      %127 = vmatpush1.msra.mxu0 0.0
      %128 = vmatprep.subr.mxu0 0.0
      %129 = vmatpush1.msra.mxu0 0.0
      %130 = vmatprep.subr.mxu0 0.0
      %131 = vmatpush1.msra.mxu0 0.0
      %132 = vmatprep.subr.mxu0 0.0
      %133 = vmatpush1.msra.mxu0 0.0
      %134 = vmatprep.subr.mxu0 0.0
      %135 = vmatpush1.msra.mxu0 0.0
      %136 = vmatprep.subr.mxu0 0.0
      %137 = vmatpush1.msra.mxu0 0.0
      %138 = vmatprep.subr.mxu0 0.0
      %139 = vmatpush1.msra.mxu0 0.0
      %140 = vmatprep.subr.mxu0 0.0
      %141 = vmatpush1.msra.mxu0 0.0
      %142 = vmatprep.subr.mxu0 0.0
      %143 = vmatpush1.msra.mxu0 0.0
      %144 = vmatprep.subr.mxu0 0.0
      %145 = vmatpush1.msra.mxu0 0.0
      %146 = vmatprep.subr.mxu0 0.0
      %147 = vmatpush1.msra.mxu0 0.0
      %148 = vmatprep.subr.mxu0 0.0
      %149 = vmatpush1.msra.mxu0 0.0
      %150 = vmatprep.subr.mxu0 0.0
      %151 = vmatpush1.msra.mxu0 0.0
      %152 = vmatprep.subr.mxu0 0.0
      %153 = vmatpush1.msra.mxu0 0.0
      %154 = vmatprep.subr.mxu0 0.0
      %155 = vmatpush1.msra.mxu0 0.0
      %156 = vmatprep.subr.mxu0 0.0
      %157 = vmatpush1.msra.mxu0 0.0
      %158 = vmatprep.subr.mxu0 0.0
      %159 = vmatpush1.msra.mxu0 0.0
      %160 = vmatprep.subr.mxu0 0.0
      %161 = vmatpush1.msra.mxu0 0.0
      %162 = vmatprep.subr.mxu0 0.0
      %163 = vmatpush1.msra.mxu0 0.0
      %164 = vmatprep.subr.mxu0 0.0
      %165 = vmatpush1.msra.mxu0 0.0
      %166 = vmatprep.subr.mxu0 0.0
      %167 = vmatpush1.msra.mxu0 0.0
      %168 = vmatprep.subr.mxu0 0.0
      %169 = vmatpush1.msra.mxu0 0.0
      %170 = vmatprep.mubr.f32.mxu0 0.0
      %171 = vmatmul.mubr.f32.gmra.mrb[0].mxu0 %v59
      %v172 = vpop.f32.mrb[0].mxu0
      %v173 = vadd.f32 0.0, %v172
      %v174 = vpop.f32.mrb[0].mxu0
      %175 = vmatprep.mubr.f32.mxu0 0.0
      %176 = vmatmul.mubr.f32.gmra.mrb[0].mxu0 %v62
      %v177 = vpop.f32.mrb[0].mxu0
      %v178 = vadd.f32 0.0, %v177
      %v179 = vpop.f32.mrb[0].mxu0
      %180 = vmatprep.mubr.f32.mxu0 0.0
      %181 = vmatmul.mubr.f32.gmra.mrb[0].mxu0 %v65
      %v182 = vpop.f32.mrb[0].mxu0
      %v183 = vadd.f32 0.0, %v182
      %v184 = vpop.f32.mrb[0].mxu0
      %185 = vmatprep.mubr.f32.mxu0 0.0
      %186 = vmatmul.mubr.f32.gmra.mrb[0].mxu0 %v68
      %v187 = vpop.f32.mrb[0].mxu0
      %v188 = vadd.f32 0.0, %v187
      %v189 = vpop.f32.mrb[0].mxu0
      %190 = vmatprep.mubr.f32.mxu0 0.0
      %191 = vmatmul.mubr.f32.gmra.mrb[0].mxu0 %v71
      %v192 = vpop.f32.mrb[0].mxu0
      %v193 = vadd.f32 0.0, %v192
      %v194 = vpop.f32.mrb[0].mxu0
      %195 = vmatprep.mubr.f32.mxu0 0.0
      %196 = vmatmul.mubr.f32.gmra.mrb[0].mxu0 %v74
      %v197 = vpop.f32.mrb[0].mxu0
      %v198 = vadd.f32 0.0, %v197
      %v199 = vpop.f32.mrb[0].mxu0
      %200 = vmatprep.mubr.f32.mxu0 0.0
      %201 = vmatmul.mubr.f32.gmra.mrb[0].mxu0 %v77
      %v202 = vpop.f32.mrb[0].mxu0
      %v203 = vadd.f32 0.0, %v202
      %v204 = vpop.f32.mrb[0].mxu0
      %205 = vmatprep.mubr.f32.mxu0 0.0
      %206 = vmatmul.mubr.f32.gmra.mrb[0].mxu0 %v80
      %v207 = vpop.f32.mrb[0].mxu0
      %v208 = vadd.f32 0.0, %v207
      %v209 = vpop.f32.mrb[0].mxu0
      %210 = vmatprep.mubr.f32.mxu0 0.0
      %211 = vmatmul.mubr.f32.gmra.mrb[0].mxu0 %v83
      %v212 = vpop.f32.mrb[0].mxu0
      %v213 = vadd.f32 0.0, %v212
      %v214 = vpop.f32.mrb[0].mxu0
      %215 = vmatprep.mubr.f32.mxu0 0.0
      %216 = vmatmul.mubr.f32.gmra.mrb[0].mxu0 %v86
      %v217 = vpop.f32.mrb[0].mxu0
      %v218 = vadd.f32 0.0, %v217
      %v219 = vpop.f32.mrb[0].mxu0
      %220 = vmatprep.mubr.f32.mxu0 0.0
      %221 = vmatmul.mubr.f32.gmra.mrb[0].mxu0 %v89
      %v222 = vpop.f32.mrb[0].mxu0
      %v223 = vadd.f32 0.0, %v222
      %v224 = vpop.f32.mrb[0].mxu0
      %225 = vmatprep.mubr.f32.mxu0 0.0
      %226 = vmatmul.mubr.f32.gmra.mrb[0].mxu0 %v92
      %v227 = vpop.f32.mrb[0].mxu0
      %v228 = vadd.f32 0.0, %v227
      %v229 = vpop.f32.mrb[0].mxu0
      %230 = vmatprep.mubr.f32.mxu0 0.0
      %231 = vmatmul.mubr.f32.gmra.mrb[0].mxu0 %v95
      %v232 = vpop.f32.mrb[0].mxu0
      %v233 = vadd.f32 0.0, %v232
      %v234 = vpop.f32.mrb[0].mxu0
      %235 = vmatprep.mubr.f32.mxu0 0.0
      %236 = vmatmul.mubr.f32.gmra.mrb[0].mxu0 %v98
      %v237 = vpop.f32.mrb[0].mxu0
      %v238 = vadd.f32 0.0, %v237
      %v239 = vpop.f32.mrb[0].mxu0
      %240 = vmatprep.mubr.f32.mxu0 0.0
      %241 = vmatmul.mubr.f32.gmra.mrb[0].mxu0 %v101
      %v242 = vpop.f32.mrb[0].mxu0
      %v243 = vadd.f32 0.0, %v242
      %v244 = vpop.f32.mrb[0].mxu0
      %245 = vmatprep.mubr.f32.mxu0 0.0
      %246 = vmatmul.mubr.f32.gmra.mrb[0].mxu0 %v104
      %v247 = vpop.f32.mrb[0].mxu0
      %v248 = vadd.f32 0.0, %v247
      %v249 = vpop.f32.mrb[0].mxu0
      %250 = vdwg.mxu0
      %251 = vmatprep.subr.mxu0 0.0
      %252 = vmatpush1.msra.mxu0 %v173
      %253 = vmatprep.subr.mxu0 0.0
      %254 = vmatpush1.msra.mxu0 %v178
      %255 = vmatprep.subr.mxu0 0.0
      %256 = vmatpush1.msra.mxu0 %v183
      %257 = vmatprep.subr.mxu0 0.0
      %258 = vmatpush1.msra.mxu0 %v188
      %259 = vmatprep.subr.mxu0 0.0
      %260 = vmatpush1.msra.mxu0 %v193
      %261 = vmatprep.subr.mxu0 0.0
      %262 = vmatpush1.msra.mxu0 %v198
      %263 = vmatprep.subr.mxu0 0.0
      %264 = vmatpush1.msra.mxu0 %v203
      %265 = vmatprep.subr.mxu0 0.0
      %266 = vmatpush1.msra.mxu0 %v208
      %267 = vmatprep.subr.mxu0 0.0
      %268 = vmatpush1.msra.mxu0 %v213
      %269 = vmatprep.subr.mxu0 0.0
      %270 = vmatpush1.msra.mxu0 %v218
      %271 = vmatprep.subr.mxu0 0.0
      %272 = vmatpush1.msra.mxu0 %v223
      %273 = vmatprep.subr.mxu0 0.0
      %274 = vmatpush1.msra.mxu0 %v228
      %275 = vmatprep.subr.mxu0 0.0
      %276 = vmatpush1.msra.mxu0 %v233
      %277 = vmatprep.subr.mxu0 0.0
      %278 = vmatpush1.msra.mxu0 %v238
      %279 = vmatprep.subr.mxu0 0.0
      %280 = vmatpush1.msra.mxu0 %v243
      %281 = vmatprep.subr.mxu0 0.0
      %282 = vmatpush1.msra.mxu0 %v248
      %283 = vmatprep.subr.mxu0 0.0
      %284 = vmatpush1.msra.mxu0 0.0
      %285 = vmatprep.subr.mxu0 0.0
      %286 = vmatpush1.msra.mxu0 0.0
      %287 = vmatprep.subr.mxu0 0.0
      %288 = vmatpush1.msra.mxu0 0.0
      %289 = vmatprep.subr.mxu0 0.0
      %290 = vmatpush1.msra.mxu0 0.0
      %291 = vmatprep.subr.mxu0 0.0
      %292 = vmatpush1.msra.mxu0 0.0
      %293 = vmatprep.subr.mxu0 0.0
      %294 = vmatpush1.msra.mxu0 0.0
      %295 = vmatprep.subr.mxu0 0.0
      %296 = vmatpush1.msra.mxu0 0.0
      %297 = vmatprep.subr.mxu0 0.0
      %298 = vmatpush1.msra.mxu0 0.0
      %299 = vmatprep.subr.mxu0 0.0
      %300 = vmatpush1.msra.mxu0 0.0
      %301 = vmatprep.subr.mxu0 0.0
      %302 = vmatpush1.msra.mxu0 0.0
      %303 = vmatprep.subr.mxu0 0.0
      %304 = vmatpush1.msra.mxu0 0.0
      %305 = vmatprep.subr.mxu0 0.0
      %306 = vmatpush1.msra.mxu0 0.0
      %307 = vmatprep.subr.mxu0 0.0
      %308 = vmatpush1.msra.mxu0 0.0
      %309 = vmatprep.subr.mxu0 0.0
      %310 = vmatpush1.msra.mxu0 0.0
      %311 = vmatprep.subr.mxu0 0.0
      %312 = vmatpush1.msra.mxu0 0.0
      %313 = vmatprep.subr.mxu0 0.0
      %314 = vmatpush1.msra.mxu0 0.0
      %315 = vmatprep.mubr.f32.mxu0 0.0
      %316 = vmatmul.mubr.f32.gmra.mrb[0].mxu0 %v25
      %v317 = vpop.f32.mrb[0].mxu0
      %v318 = vadd.f32 0.0, %v317
      %v319 = vpop.f32.mrb[0].mxu0
      %320 = vdwg.mxu0
      %v321 = vsub.f32 %v318, 0.6
      %v322 = vld [vmem:[#allocation2] sm:$0x3]
      %v323 = vmul.f32 %v321, %v321
      %v324 = vadd.f32 %v322, %v323
      %vm325 = vcmask 9216
      %326 = vst.msk [vmem:[#allocation2] sm:$0x3] %vm325, %v324
    $region22: #{tpu_custom_call.1} parent=1 // loop_footer
      %s36 = sadd.s32 %s34, 1
    $region23: #{tpu_custom_call.1} parent=1 // loop_footer_branch
      %33 = sbr.rel target = $region19
    $region24: #{tpu_custom_call.1} parent=1 // loop_exit
      _
    // Predicated region
    $region25: #{tpu_custom_call.1} parent=1 // pred_check
      %p327 = pneg %p15
    $region26: #{tpu_custom_call.1} parent=1 // pred_check_branch
      %329 = sbr.rel (%p327) target = $region28
    $region27: #{tpu_custom_call.1} parent=1 // pred_region
      %v330 = vld [vmem:[#allocation2] sm:$0x3]
      %vm331 = vcmask 9216
      %v332 = vsel %vm331, %v330, 0.0
      %333 = vadd.xlane.f32.xlu0 %v332
      %v334 = vpop.xlane.xlu0 %333
      %v335 = vrot.slane %v334, 4
      %v336 = vadd.f32 %v334, %v335
      %v337 = vrot.slane %v336, 2
      %v338 = vadd.f32 %v336, %v337
      %v339 = vrot.slane %v338, 1
      %v340 = vadd.f32 %v338, %v339
      %s341 = vtos %v340
      %v342 = vstv %s341
      %343 = vst [vmem:[#allocation3] sm:$0xff] %v342
    $region28: #{tpu_custom_call.1} parent=1 // pred_fallthru
      _
    // Predicated region
    $region29: #{tpu_custom_call.1} parent=1 // pred_check
      _
    $region30: #{tpu_custom_call.1} parent=1 // pred_check_branch
      %345 = sbr.rel (0) target = $region32
    $region31: #{tpu_custom_call.1} parent=1 // pred_region
      %s347 = ssub.s32 128, 128
      %348 = vsyncadd [#allocation4], %s347
      %s350 = sshll.u32 [#allocation3], 4
      %s351 = int_to_ptr.vmem [resolvable:$true] %s350
      %353 = dma.vmem_to_hbm [thread:$0]  %s351, 128, %s3, [#allocation4]
    $region32: #{tpu_custom_call.1} parent=1 // pred_fallthru
      _
    // Predicated region
    $region33: #{tpu_custom_call.1} parent=1 // pred_check
      _
    $region34: #{tpu_custom_call.1} parent=1 // pred_check_branch
      %355 = sbr.rel (0) target = $region36
    $region35: #{tpu_custom_call.1} parent=1 // pred_region
      %356 = dma.done [#allocation4], 128
    $region36: #{tpu_custom_call.1} parent=1 // pred_fallthru
      _
    %357 = vsyncpa [#allocation4], 1

</llo_original>
